<compile_context>
chip_gen: v7x
topology: tpu7x:2x2x1
jax: 0.10.0
libtpu: 0.0.40
codegen_flags: <defaults>
</compile_context>

<pallas_src>
import functools

import jax
import jax.numpy as jnp
from jax.experimental import pallas as pl
from jax.experimental.pallas import tpu as pltpu


def _round_up(x, m):
    return ((x + m - 1) // m) * m


def _vmem_capacity_bytes():
    try:
        return int(pltpu.get_tpu_info().vmem_capacity_bytes)
    except Exception:
        return 64 * 1024 * 1024  # conservative (v7x-sized) fallback


def _patch_embed_kernel(x_ref, w_ref, b_ref, o_ref):
    # x_ref: (tm, K) patch rows; w_ref: (K, tn); b_ref: (1, tn) f32; o_ref: (tm, tn).
    acc = jnp.dot(x_ref[...], w_ref[...], preferred_element_type=jnp.float32)
    o_ref[...] = (acc + b_ref[...]).astype(o_ref.dtype)


def _pick_tm(M, K, tn, in_bytes, out_bytes, w_bufs, budget, gran):
    """Largest row tile (multiple of `gran`, <=1024) whose working set fits `budget`,
    additionally capped so the grid has >= 2 steps (v7x megacore) when possible."""
    fixed = w_bufs * K * tn * in_bytes + tn * 4            # resident weight (+ bias)
    per_row = 2 * (K * in_bytes + tn * out_bytes)          # double-buffered x + out rows
    cap = max(gran, (budget - fixed) // per_row)
    half = _round_up(max(1, -(-M // 2)), gran)             # >= 2 grid steps if possible
    tm = min(1024, cap, half)
    tm = max(gran, (tm // gran) * gran)
    if tm >= M:
        tm = M                                             # single full block is always legal
    return tm


@functools.partial(
    jax.jit,
    static_argnames=("patch_size", "compute_dtype", "out_dtype", "vmem_budget_bytes"),
)
def patch_embedding(x, weight, bias, *, patch_size, compute_dtype=None,
                    out_dtype=None, vmem_budget_bytes=None):
    """x: (B, 3, H, W); weight: (E, 3, P, P); bias: (E,).  Returns (B, num_patches, E).

    compute_dtype: GEMM operand dtype (bf16 halves HBM traffic; recommended on v5e
      where f32 sits at the compute/memory ridge).  Accumulation is always f32.
    out_dtype: output dtype (bf16 halves the largest single HBM stream).
    """
    B, C, H, W = x.shape
    P = patch_size
    E = weight.shape[0]
    nh, nw = H // P, W // P
    num_patches = nh * nw
    K = C * P * P
    M = B * num_patches

    in_dt = jnp.dtype(compute_dtype) if compute_dtype is not None else jnp.dtype(x.dtype)
    out_dt = jnp.dtype(out_dtype) if out_dtype is not None else jnp.dtype(x.dtype)
    in_bytes = in_dt.itemsize
    out_bytes = out_dt.itemsize
    gran = 16 if in_bytes == 2 else 8                      # native sublane tile

    # ---- patchify rows in (c, kh, kw) order: one cast+transpose fusion on the host
    #      side of the call; allow_input_fusion below lets XLA fold it into the input
    #      DMA of the pallas_call rather than materializing xp in HBM. ----
    xp = x.astype(in_dt).reshape(B, C, nh, P, nw, P)
    xp = jnp.transpose(xp, (0, 2, 4, 1, 3, 5)).reshape(M, K)

    # Weight as (K, E) with E zero-padded to a lane-dense multiple of 128 (exact).
    Ep = _round_up(E, 128)
    w2d = weight.reshape(E, K).T.astype(in_dt)
    b2d = bias.astype(jnp.float32).reshape(1, E)
    if Ep != E:
        w2d = jnp.pad(w2d, ((0, 0), (0, Ep - E)))
        b2d = jnp.pad(b2d, ((0, 0), (0, Ep - E)))

    # ---- generation-aware VMEM budgeting ----
    vmem_cap = _vmem_capacity_bytes()
    budget = vmem_budget_bytes if vmem_budget_bytes is not None else (vmem_cap * 2) // 5
    vmem_limit = int(min((vmem_cap * 3) // 4, max(32 * 1024 * 1024, 2 * budget)))

    w_vmem = K * Ep * in_bytes  # single-buffered resident weight
    if w_vmem <= budget // 4:
        # Path A: whole weight resident (single-buffered), 1-D grid over row blocks.
        tm = _pick_tm(M, K, Ep, in_bytes, out_bytes, w_bufs=1, budget=budget, gran=gran)
        grid = (pl.cdiv(M, tm),)
        in_specs = [
            pl.BlockSpec((tm, K), lambda i: (i, 0)),
            pl.BlockSpec((K, Ep), lambda i: (0, 0), pipeline_mode=pl.Buffered(1)),
            pl.BlockSpec((1, Ep), lambda i: (0, 0), pipeline_mode=pl.Buffered(1)),
        ]
        out_specs = pl.BlockSpec((tm, Ep), lambda i: (i, 0))
        dim_sem = ("parallel",)
    else:
        # Path B: also tile E (large E*K weights; matters most on v7x's 64 MiB VMEM).
        tn = 128
        while (tn * 2 <= Ep and Ep % (tn * 2) == 0
               and 2 * K * (tn * 2) * in_bytes <= budget // 2):
            tn *= 2
        tm = _pick_tm(M, K, tn, in_bytes, out_bytes, w_bufs=2, budget=budget, gran=gran)
        grid = (pl.cdiv(Ep, tn), pl.cdiv(M, tm))
        in_specs = [
            pl.BlockSpec((tm, K), lambda e, m: (m, 0)),
            pl.BlockSpec((K, tn), lambda e, m: (0, e)),
            pl.BlockSpec((1, tn), lambda e, m: (0, e)),
        ]
        out_specs = pl.BlockSpec((tm, tn), lambda e, m: (m, e))
        dim_sem = ("parallel", "parallel")

    cost = pl.CostEstimate(
        flops=2 * M * K * Ep,
        transcendentals=0,
        bytes_accessed=in_bytes * (M * K + K * Ep) + 4 * Ep + out_bytes * M * Ep,
    )

    out2d = pl.pallas_call(
        _patch_embed_kernel,
        out_shape=jax.ShapeDtypeStruct((M, Ep), out_dt),
        grid=grid,
        in_specs=in_specs,
        out_specs=out_specs,
        compiler_params=pltpu.CompilerParams(
            dimension_semantics=dim_sem,
            vmem_limit_bytes=vmem_limit,
            allow_input_fusion=[True, False, False],
        ),
        cost_estimate=cost,
    )(xp, w2d, b2d)

    if Ep != E:
        out2d = out2d[:, :E]
    return out2d.reshape(B, num_patches, E)


def _reference(x, weight, bias, patch_size):
    out = jax.lax.conv_general_dilated(
        x, weight,
        window_strides=(patch_size, patch_size),
        padding="VALID",
        dimension_numbers=("NCHW", "OIHW", "NCHW"),
        precision=jax.lax.Precision.HIGHEST,
    ) + bias[None, :, None, None]
    B, E, nh, nw = out.shape
    return jnp.transpose(out.reshape(B, E, nh * nw), (0, 2, 1))


def _make_inputs(key, batch, img, patch, embed):
    kx, kw, kb = jax.random.split(key, 3)
    x = jax.random.normal(kx, (batch, 3, img, img), dtype=jnp.float32)
    fan_in = 3 * patch * patch
    bound = 1.0 / (fan_in ** 0.5)
    w = jax.random.uniform(kw, (embed, 3, patch, patch),
                           minval=-bound, maxval=bound, dtype=jnp.float32)
    b = jax.random.uniform(kb, (embed,), minval=-bound, maxval=bound, dtype=jnp.float32)
    return x, w, b


if __name__ == "__main__":
    key = jax.random.PRNGKey(0)
    k1, k2 = jax.random.split(key)

    # 1) f32, resident-weight path.  Tolerance covers default (non-HIGHEST) MXU f32
    #    precision; a layout/indexing bug would be O(1) off, far above this.
    x, w, b = _make_inputs(k1, batch=2, img=16, patch=4, embed=32)
    ref = _reference(x, w, b, 4)
    out = jax.block_until_ready(patch_embedding(x, w, b, patch_size=4))
    assert out.shape == (2, 16, 32)
    assert jnp.allclose(out, ref, atol=1e-2, rtol=1e-2), "f32 mismatch vs reference"

    # 2) bf16 operands + bf16 output (halved HBM traffic, f32 accumulation).
    out_bf16 = jax.block_until_ready(
        patch_embedding(x, w, b, patch_size=4,
                        compute_dtype=jnp.bfloat16, out_dtype=jnp.bfloat16))
    assert out_bf16.shape == (2, 16, 32) and out_bf16.dtype == jnp.bfloat16
    assert jnp.allclose(out_bf16.astype(jnp.float32), ref, atol=5e-2, rtol=5e-2), \
        "bf16 mismatch vs reference"

    # 3) E-tiled fallback path + ragged last row block (forced tiny VMEM budget).
    x3, w3, b3 = _make_inputs(k2, batch=8, img=12, patch=4, embed=256)
    ref3 = _reference(x3, w3, b3, 4)
    out3 = jax.block_until_ready(
        patch_embedding(x3, w3, b3, patch_size=4, vmem_budget_bytes=128 * 1024))
    assert out3.shape == (8, 9, 256)
    assert jnp.allclose(out3, ref3, atol=1e-2, rtol=1e-2), "E-tiled path mismatch"

    print("KERNEL_OK")
</pallas_src>

<mosaic_0001>
module attributes {stable_mosaic.version = 11 : i64} {
  func.func @_patch_embed_kernel(%arg0: i32, %arg1: memref<16x48xf32, #tpu.memory_space<vmem>>, %arg2: memref<48x128xf32, #tpu.memory_space<vmem>>, %arg3: memref<1x128xf32, #tpu.memory_space<vmem>>, %arg4: memref<16x128xf32, #tpu.memory_space<vmem>>) attributes {dimension_semantics = [#tpu.dimension_semantics<parallel>], iteration_bounds = array<i64: 2>, scalar_prefetch = 0 : i64, scratch_operands = 0 : i64, tpu.core_type = #tpu.core_type<tc>, window_params = [{transform_indices = @transform_0, window_bounds = array<i64: 16, 48>}, {pipeline_mode = #tpu.pipeline_mode<synchronous>, transform_indices = @transform_1, window_bounds = array<i64: 48, 128>}, {pipeline_mode = #tpu.pipeline_mode<synchronous>, transform_indices = @transform_2, window_bounds = array<i64: 1, 128>}, {transform_indices = @transform_3, window_bounds = array<i64: 16, 128>}]} {
    %c0 = arith.constant 0 : index
    %c0_0 = arith.constant 0 : index
    %0 = vector.load %arg1[%c0, %c0_0] : memref<16x48xf32, #tpu.memory_space<vmem>>, vector<16x48xf32>
    %c0_1 = arith.constant 0 : index
    %c0_2 = arith.constant 0 : index
    %1 = vector.load %arg2[%c0_1, %c0_2] : memref<48x128xf32, #tpu.memory_space<vmem>>, vector<48x128xf32>
    %cst = arith.constant dense<0.000000e+00> : vector<16x128xf32>
    %2 = tpu.matmul %0, %1, %cst {dimension_numbers = #tpu.dot_dimension_numbers<[1], [0], [0], [1], [0, 0, 1, 1], [], []>} : vector<16x48xf32>, vector<48x128xf32>, vector<16x128xf32> -> vector<16x128xf32>
    %c0_3 = arith.constant 0 : index
    %c0_4 = arith.constant 0 : index
    %3 = vector.load %arg3[%c0_3, %c0_4] : memref<1x128xf32, #tpu.memory_space<vmem>>, vector<1x128xf32>
    %4 = vector.broadcast %3 : vector<1x128xf32> to vector<16x128xf32>
    %5 = arith.addf %2, %4 : vector<16x128xf32>
    %c0_5 = arith.constant 0 : index
    %c0_6 = arith.constant 0 : index
    %6 = vector.load %arg4[%c0_5, %c0_6] : memref<16x128xf32, #tpu.memory_space<vmem>>, vector<16x128xf32>
    tpu.vector_store %arg4[%c0_5, %c0_6], %5 {strides = array<i32>} : memref<16x128xf32, #tpu.memory_space<vmem>>, vector<16x128xf32>,
    return
  }
  func.func @transform_0(%arg0: i32) -> (i32, i32) {
    %c0_i32 = arith.constant 0 : i32
    %c0_i32_0 = arith.constant 0 : i32
    return %arg0, %c0_i32 : i32, i32
  }
  func.func @transform_1(%arg0: i32) -> (i32, i32) {
    %c0_i32 = arith.constant 0 : i32
    %c0_i32_0 = arith.constant 0 : i32
    %c0_i32_1 = arith.constant 0 : i32
    return %c0_i32, %c0_i32_0 : i32, i32
  }
  func.func @transform_2(%arg0: i32) -> (i32, i32) {
    %c0_i32 = arith.constant 0 : i32
    %c0_i32_0 = arith.constant 0 : i32
    %c0_i32_1 = arith.constant 0 : i32
    return %c0_i32, %c0_i32_0 : i32, i32
  }
  func.func @transform_3(%arg0: i32) -> (i32, i32) {
    %c0_i32 = arith.constant 0 : i32
    %c0_i32_0 = arith.constant 0 : i32
    return %arg0, %c0_i32 : i32, i32
  }
}

</mosaic_0001>

<llo_original>
// kernel: patch_embedding.1
$region0: #{patch_embedding.1}
  #allocation0 [shape = 'u32[]', space=smem, size = 0x4, offset = 0x4, fixed_abs, tag = 'smem constant byte address 0x4 - core index']
  #allocation1 [shape = 'u32[144,128]{1,0:T(1,128)}', space=vmem, size = 0x12000, scoped, tag = 'internal scratch']
  %s0 = inlined_call_operand.vmem [shape: f32[32,48], index: 0, kind: input, shape index: {}]
  %s1 = inlined_call_operand.vmem [shape: f32[48,128], index: 1, kind: input, shape index: {}]
  %s2 = inlined_call_operand.vmem [shape: f32[1,128], index: 2, kind: input, shape index: {}]
  %s3 = inlined_call_operand.hbm [shape: f32[32,128], index: 3, kind: output, shape index: {}]
  %s4 = sld [smem:[#allocation0]]
  $region45: #{patch_embedding.1} parent=0
    _
  %s6 = ssub.s32 1, %s4
  %s7 = scalar_select 0, %s6, %s4
  $region1: #{patch_embedding.1} parent=0
    #allocation2 [shape = 'u8[16384]{0}', space=vmem, size = 0x4000, scoped, tag = 'output window, operand 0']
    #allocation3 [shape = 's32[2]{0}', space=sflag, size = 0x8, scoped, tag = 'scoped memory for patch_embedding.1']
    %8 = vsyncpa [#allocation3], 0
    %s9 = scalar_lea.sflag [#allocation3], 1
    %10 = vsyncpa %s9, 0
    loop: start=0, step=1, limit=4
    $region2: #{patch_embedding.1} parent=1 // loop_pre_header
      _
    $region3: #{patch_embedding.1} parent=1 // loop_header
      %s12 = sphi 0, %s16
      %p13 = scmp.ge.s32.totalorder %s12, 4
      %s22 = sphi 0, %s24
      %s25 = sphi 0, %s22
      %s26 = sphi 0, %s25
      %s42 = sphi 0, %s26
      %s46 = sphi 0, %s46
      %s48 = sphi 0, %s46
      %s49 = sphi 0, %s48
      %s63 = sphi 0, %s49
      %s67 = sphi 0, %s67
      %s69 = sphi 0, %s67
      %s70 = sphi 0, %s69
      %s84 = sphi 0, %s70
      %s90 = sphi 0, %s92
      %s93 = sphi 0, %s90
      %s94 = sphi 0, %s93
      %s110 = sphi 0, %s94
    $region4: #{patch_embedding.1} parent=1 // loop_header_branch
      %15 = sbr.rel (%p13) target = $region8
    $region5: #{patch_embedding.1} parent=1 // loop_body
      %s17 = ssub.s32 %s12, 1
      %s18 = ssub.s32 %s12, 2
      %s19 = sadd.s32 %s12, 1
      %s20 = ssub.s32 %s12, %s19
      %p21 = scmp.eq.s32.totalorder %s20, 0
      %s23 = sadd.s32 %s22, 1
      %s24 = scalar_select %p21, %s22, %s23
      %p27 = pneg %p21
      %p28 = scmp.eq.s32.totalorder %s12, 1
      %p29 = por %p27, %p28
      %p30 = scmp.ne.s32.totalorder %s22, %s25
      %p31 = scmp.eq.s32.totalorder %s12, 0
      %p32 = por %p30, %p31
      %p33 = scmp.ne.s32.totalorder %s22, %s25
      %p34 = scmp.eq.s32.totalorder %s17, 1
      %p35 = por %p33, %p34
      %p36 = scmp.ne.s32.totalorder %s25, %s26
      %p37 = scmp.eq.s32.totalorder %s17, 0
      %p38 = por %p36, %p37
      %p39 = scmp.ne.s32.totalorder %s25, %s26
      %p40 = scmp.eq.s32.totalorder %s18, 1
      %p41 = por %p39, %p40
      %p43 = scmp.ne.s32.totalorder %s26, %s42
      %p44 = scmp.eq.s32.totalorder %s18, 0
      %p45 = por %p43, %p44
      %s47 = sadd.s32 %s46, 1
      %p50 = scmp.eq.s32.totalorder %s12, 1
      %p51 = scmp.ne.s32.totalorder %s46, %s48
      %p52 = scmp.eq.s32.totalorder %s12, 0
      %p53 = por %p51, %p52
      %p54 = scmp.ne.s32.totalorder %s46, %s48
      %p55 = scmp.eq.s32.totalorder %s17, 1
      %p56 = por %p54, %p55
      %p57 = scmp.ne.s32.totalorder %s48, %s49
      %p58 = scmp.eq.s32.totalorder %s17, 0
      %p59 = por %p57, %p58
      %p60 = scmp.ne.s32.totalorder %s48, %s49
      %p61 = scmp.eq.s32.totalorder %s18, 1
      %p62 = por %p60, %p61
      %p64 = scmp.ne.s32.totalorder %s49, %s63
      %p65 = scmp.eq.s32.totalorder %s18, 0
      %p66 = por %p64, %p65
      %s68 = sadd.s32 %s67, 1
      %p71 = scmp.eq.s32.totalorder %s12, 1
      %p72 = scmp.ne.s32.totalorder %s67, %s69
      %p73 = scmp.eq.s32.totalorder %s12, 0
      %p74 = por %p72, %p73
      %p75 = scmp.ne.s32.totalorder %s67, %s69
      %p76 = scmp.eq.s32.totalorder %s17, 1
      %p77 = por %p75, %p76
      %p78 = scmp.ne.s32.totalorder %s69, %s70
      %p79 = scmp.eq.s32.totalorder %s17, 0
      %p80 = por %p78, %p79
      %p81 = scmp.ne.s32.totalorder %s69, %s70
      %p82 = scmp.eq.s32.totalorder %s18, 1
      %p83 = por %p81, %p82
      %p85 = scmp.ne.s32.totalorder %s70, %s84
      %p86 = scmp.eq.s32.totalorder %s18, 0
      %p87 = por %p85, %p86
      %s88 = ssub.s32 %s12, %s19
      %p89 = scmp.eq.s32.totalorder %s88, 0
      %s91 = sadd.s32 %s90, 1
      %s92 = scalar_select %p89, %s90, %s91
      %p95 = pneg %p89
      %p96 = scmp.eq.s32.totalorder %s12, 1
      %p97 = por %p95, %p96
      %p98 = scmp.ne.s32.totalorder %s90, %s93
      %p99 = scmp.eq.s32.totalorder %s12, 0
      %p100 = por %p98, %p99
      %p101 = scmp.ne.s32.totalorder %s90, %s93
      %p102 = scmp.eq.s32.totalorder %s17, 1
      %p103 = por %p101, %p102
      %p104 = scmp.ne.s32.totalorder %s93, %s94
      %p105 = scmp.eq.s32.totalorder %s17, 0
      %p106 = por %p104, %p105
      %p107 = scmp.ne.s32.totalorder %s93, %s94
      %p108 = scmp.eq.s32.totalorder %s18, 1
      %p109 = por %p107, %p108
      %p111 = scmp.ne.s32.totalorder %s94, %s110
      %p112 = scmp.eq.s32.totalorder %s18, 0
      %p113 = por %p111, %p112
      %p114 = scmp.le.s32.totalorder 1, %s12
      %p115 = scmp.lt.s32.totalorder %s12, 3
      %p116 = pnand %p114, %p115
      %p117 = pneg %p116
      // Predicated region
      $region9: #{patch_embedding.1} parent=5 // pred_check
        _
      $region10: #{patch_embedding.1} parent=5 // pred_check_branch
        %119 = sbr.rel (%p116) target = $region12
      $region11: #{patch_embedding.1} parent=5 // pred_region
        %s120 = ssub.s32 %s12, 1
        // Predicated region
        $region13: #{patch_embedding.1} parent=11 // pred_check
          %p121 = pneg %p59
        $region14: #{patch_embedding.1} parent=11 // pred_check_branch
          %123 = sbr.rel (%p121) target = $region16
        $region15: #{patch_embedding.1} parent=11 // pred_region
          _
        $region16: #{patch_embedding.1} parent=11 // pred_fallthru
          _
        // Predicated region
        $region17: #{patch_embedding.1} parent=11 // pred_check
          %p124 = pneg %p80
        $region18: #{patch_embedding.1} parent=11 // pred_check_branch
          %126 = sbr.rel (%p124) target = $region20
        $region19: #{patch_embedding.1} parent=11 // pred_region
          _
        $region20: #{patch_embedding.1} parent=11 // pred_fallthru
          _
      $region12: #{patch_embedding.1} parent=5 // pred_fallthru
        _
      %p127 = scmp.lt.s32.totalorder %s12, 2
      // Predicated region
      $region21: #{patch_embedding.1} parent=5 // pred_check
        %p128 = pneg %p127
      $region22: #{patch_embedding.1} parent=5 // pred_check_branch
        %130 = sbr.rel (%p128) target = $region24
      $region23: #{patch_embedding.1} parent=5 // pred_region
        // Predicated region
        $region25: #{patch_embedding.1} parent=23 // pred_check
          %p131 = pneg %p32
        $region26: #{patch_embedding.1} parent=23 // pred_check_branch
          %133 = sbr.rel (%p131) target = $region28
        $region27: #{patch_embedding.1} parent=23 // pred_region
          %s134 = smul.u32 2, %s12
          %p135 = scmp.lt.s32.totalorder %s134, 3
          %s136 = scalar_select %p135, %s134, 3
          %s137 = smul.addr %s136, 8
          %s138 = scalar_lea.vmem %s0, %s137
          %s139 = smul.u32 2, %s12
        $region28: #{patch_embedding.1} parent=23 // pred_fallthru
          _
      $region24: #{patch_embedding.1} parent=5 // pred_fallthru
        _
      %p140 = scmp.le.s32.totalorder 1, %s12
      %p141 = scmp.lt.s32.totalorder %s12, 3
      %p142 = pnand %p140, %p141
      %p143 = pneg %p142
      // Predicated region
      $region29: #{patch_embedding.1} parent=5 // pred_check
        _
      $region30: #{patch_embedding.1} parent=5 // pred_check_branch
        %145 = sbr.rel (%p142) target = $region32
      $region31: #{patch_embedding.1} parent=5 // pred_region
        %s146 = ssub.s32 %s12, 1
        %s147 = smul.u32 2, %s17
        %p148 = scmp.lt.s32.totalorder %s147, 3
        %s149 = scalar_select %p148, %s147, 3
        %s150 = smul.addr %s149, 8
        %s151 = scalar_lea.vmem %s0, %s150
        %p152 = pneg %p38
        %p153 = pneg %p35
        %p154 = pneg %p59
        %p155 = pneg %p56
        %p156 = pneg %p80
        %p157 = pneg %p77
        %p158 = pneg %p106
        %p159 = pneg %p103
        %s160 = sand.u32 %s93, 1
        %s161 = scalar_lea.sflag [#allocation3], %s160
        %s162 = sand.u32 %s93, 1
        %s163 = smul.addr %s162, 16
        %s164 = scalar_lea.vmem [#allocation2], %s163
        %s165 = smul.u32 2, %s17
        %p166 = scmp.lt.s32.totalorder %s165, 3
        %s167 = scalar_select %p166, %s165, 3
        %s168 = smul.addr %s167, 8
        %s169 = scalar_lea.vmem %s0, %s168
        %s170 = smul.u32 2, %s17
        %s171 = smul.u32 2, %s17
        %v172 = vld [vmem:[%s169] sm:$0xff]
        %v173 = vld [vmem:[%s169 + $0x8] sm:$0xff]
        %v174 = vld [vmem:[%s1] sm:$0xff]
        %v175 = vld [vmem:[%s1 + $0x8] sm:$0xff]
        %v176 = vld [vmem:[%s1 + $0x10] sm:$0xff]
        %v177 = vld [vmem:[%s1 + $0x18] sm:$0xff]
        %v178 = vld [vmem:[%s1 + $0x20] sm:$0xff]
        %v179 = vld [vmem:[%s1 + $0x28] sm:$0xff]
        %v180 = vld [vmem:[%s2] sm:$0x1]
        %v182 = vlaneseq
        %v183 = vshrl.u32 %v182, 7
        %v184 = vsub.s32 0, %v183
        %v185 = vrot.slane %v180, %v184
        %vm187 = vcmask 392192
        %v189 = vsel %vm187, %v172, 0
        %v192 = vsel %vm187, %v173, 0
        %194 = vmatprep.subr.mxu0 0.0
        %195 = vmatpush1.msra.mxu0 %v174
        %196 = vmatprep.subr.mxu0 0.0
        %197 = vmatpush1.msra.mxu0 %v175
        %198 = vmatprep.subr.mxu0 0.0
        %199 = vmatpush1.msra.mxu0 %v176
        %200 = vmatprep.subr.mxu0 0.0
        %201 = vmatpush1.msra.mxu0 %v177
        %202 = vmatprep.subr.mxu0 0.0
        %203 = vmatpush1.msra.mxu0 %v178
        %204 = vmatprep.subr.mxu0 0.0
        %205 = vmatpush1.msra.mxu0 %v179
        %206 = vmatprep.subr.mxu0 0.0
        %207 = vmatpush1.msra.mxu0 0.0
        %208 = vmatprep.subr.mxu0 0.0
        %209 = vmatpush1.msra.mxu0 0.0
        %210 = vmatprep.subr.mxu0 0.0
        %211 = vmatpush1.msra.mxu0 0.0
        %212 = vmatprep.subr.mxu0 0.0
        %213 = vmatpush1.msra.mxu0 0.0
        %214 = vmatprep.subr.mxu0 0.0
        %215 = vmatpush1.msra.mxu0 0.0
        %216 = vmatprep.subr.mxu0 0.0
        %217 = vmatpush1.msra.mxu0 0.0
        %218 = vmatprep.subr.mxu0 0.0
        %219 = vmatpush1.msra.mxu0 0.0
        %220 = vmatprep.subr.mxu0 0.0
        %221 = vmatpush1.msra.mxu0 0.0
        %222 = vmatprep.subr.mxu0 0.0
        %223 = vmatpush1.msra.mxu0 0.0
        %224 = vmatprep.subr.mxu0 0.0
        %225 = vmatpush1.msra.mxu0 0.0
        %226 = vmatprep.subr.mxu0 0.0
        %227 = vmatpush1.msra.mxu0 0.0
        %228 = vmatprep.subr.mxu0 0.0
        %229 = vmatpush1.msra.mxu0 0.0
        %230 = vmatprep.subr.mxu0 0.0
        %231 = vmatpush1.msra.mxu0 0.0
        %232 = vmatprep.subr.mxu0 0.0
        %233 = vmatpush1.msra.mxu0 0.0
        %234 = vmatprep.subr.mxu0 0.0
        %235 = vmatpush1.msra.mxu0 0.0
        %236 = vmatprep.subr.mxu0 0.0
        %237 = vmatpush1.msra.mxu0 0.0
        %238 = vmatprep.subr.mxu0 0.0
        %239 = vmatpush1.msra.mxu0 0.0
        %240 = vmatprep.subr.mxu0 0.0
        %241 = vmatpush1.msra.mxu0 0.0
        %242 = vmatprep.subr.mxu0 0.0
        %243 = vmatpush1.msra.mxu0 0.0
        %244 = vmatprep.subr.mxu0 0.0
        %245 = vmatpush1.msra.mxu0 0.0
        %246 = vmatprep.subr.mxu0 0.0
        %247 = vmatpush1.msra.mxu0 0.0
        %248 = vmatprep.subr.mxu0 0.0
        %249 = vmatpush1.msra.mxu0 0.0
        %250 = vmatprep.subr.mxu0 0.0
        %251 = vmatpush1.msra.mxu0 0.0
        %252 = vmatprep.subr.mxu0 0.0
        %253 = vmatpush1.msra.mxu0 0.0
        %254 = vmatprep.subr.mxu0 0.0
        %255 = vmatpush1.msra.mxu0 0.0
        %256 = vmatprep.subr.mxu0 0.0
        %257 = vmatpush1.msra.mxu0 0.0
        %258 = vmatprep.mubr.f32.mxu0 0.0
        %259 = vmatmul.mubr.f32.gmra.mrb[0].mxu0 %v189
        %v260 = vpop.f32.mrb[0].mxu0
        %v261 = vadd.f32 %v185, %v260
        %v262 = vpop.f32.mrb[0].mxu0
        %263 = vmatprep.mubr.f32.mxu0 0.0
        %264 = vmatmul.mubr.f32.gmra.mrb[0].mxu0 %v192
        %v265 = vpop.f32.mrb[0].mxu0
        %v266 = vadd.f32 %v185, %v265
        %v267 = vpop.f32.mrb[0].mxu0
        %268 = vdwg.mxu0
        %269 = vst [vmem:[%s164] sm:$0xff] %v261
        %270 = vst [vmem:[%s164 + $0x8] sm:$0xff] %v266
        %s271 = sand.u32 %s93, 1
        %s272 = scalar_lea.sflag [#allocation3], %s271
        %s273 = sand.u32 %s93, 1
        %s274 = smul.addr %s273, 16
        %s275 = scalar_lea.vmem [#allocation2], %s274
        // Predicated region
        $region33: #{patch_embedding.1} parent=31 // pred_check
          %p276 = pneg %p103
        $region34: #{patch_embedding.1} parent=31 // pred_check_branch
          %278 = sbr.rel (%p276) target = $region36
        $region35: #{patch_embedding.1} parent=31 // pred_region
          %s279 = smul.u32 2, %s17
          %s281 = ssub.s32 256, 256
          %282 = vsyncadd %s272, %s281
          %s283 = smul.addr %s279, 128
          %s284 = scalar_lea.hbm %s3, %s283
          %s285 = sshll.u32 %s275, 4
          %s286 = int_to_ptr.vmem [resolvable:$true] %s285
          %291 = dma.vmem_to_hbm [thread:$0]  %s286, 256, %s284, %s272, 128, 128, 8
        $region36: #{patch_embedding.1} parent=31 // pred_fallthru
          _
      $region32: #{patch_embedding.1} parent=5 // pred_fallthru
        _
      %p292 = scmp.le.s32.totalorder 2, %s12
      // Predicated region
      $region37: #{patch_embedding.1} parent=5 // pred_check
        %p293 = pneg %p292
      $region38: #{patch_embedding.1} parent=5 // pred_check_branch
        %295 = sbr.rel (%p293) target = $region40
      $region39: #{patch_embedding.1} parent=5 // pred_region
        %s296 = ssub.s32 %s12, 2
        // Predicated region
        $region41: #{patch_embedding.1} parent=39 // pred_check
          %p297 = pneg %p109
        $region42: #{patch_embedding.1} parent=39 // pred_check_branch
          %299 = sbr.rel (%p297) target = $region44
        $region43: #{patch_embedding.1} parent=39 // pred_region
          %s300 = sand.u32 %s94, 1
          %s301 = scalar_lea.sflag [#allocation3], %s300
          %s302 = sand.u32 %s94, 1
          %s303 = smul.addr %s302, 16
          %s304 = scalar_lea.vmem [#allocation2], %s303
          %305 = dma.done %s301, 256
        $region44: #{patch_embedding.1} parent=39 // pred_fallthru
          _
      $region40: #{patch_embedding.1} parent=5 // pred_fallthru
        _
    $region6: #{patch_embedding.1} parent=1 // loop_footer
      %s16 = sadd.s32 1, %s12
    $region7: #{patch_embedding.1} parent=1 // loop_footer_branch
      %11 = sbr.rel target = $region3
    $region8: #{patch_embedding.1} parent=1 // loop_exit
      _
    %306 = vsyncpa [#allocation3], 1
    %s307 = scalar_lea.sflag [#allocation3], 1
    %308 = vsyncpa %s307, 1

</llo_original>
